<compile_context>
chip_gen: v7x
topology: tpu7x:2x2x1
jax: 0.10.0
libtpu: 0.0.40
codegen_flags: <defaults>
</compile_context>

<pallas_src>
import functools

import jax
import jax.numpy as jnp
import numpy as np
from jax.experimental import pallas as pl
from jax.experimental.pallas import tpu as pltpu


def _decode_kernel(p_ref, off_ref, scale_ref, o_ref, *, bbox_attrs):
    """Decode a (bt, A*attrs, HW) slab of raw predictions.

    p_ref     : VMEM (bt, A*attrs, HW) raw predictions
    off_ref   : VMEM (A*attrs, HW)     resident additive offsets
                (grid_x on x-rows, grid_y on y-rows, 0 elsewhere)
    scale_ref : VMEM (A*attrs, 1)      resident per-row multiplicative scales
                (stride_w, stride_h, anchor_w, anchor_h, 1, 1, ...)
    o_ref     : VMEM (bt, A*attrs, HW) decoded outputs
    """
    p = p_ref[...].astype(jnp.float32)               # (bt, rows, HW)
    rows = p.shape[1]

    # Tiny per-sublane attribute id (one column); rows 2,3 of each anchor use exp.
    row = jax.lax.broadcasted_iota(jnp.int32, (rows, 1), 0)
    attr = jax.lax.rem(row, bbox_attrs)
    is_exp = ((attr == 2) | (attr == 3))[None]       # (1, rows, 1)

    sig = jax.nn.sigmoid(p)
    ex = jnp.exp(p)

    # x-row: (sigmoid + grid_x) * stride_w      y-row: (sigmoid + grid_y) * stride_h
    # w-row: exp * anchor_w                     h-row: exp * anchor_h
    # conf / cls rows: sigmoid
    off = off_ref[...][None]                         # (1, rows, HW)
    scale = scale_ref[...][None]                     # (1, rows, 1)
    o_ref[...] = (jnp.where(is_exp, ex, sig + off) * scale).astype(o_ref.dtype)


def decode_box(inputs, anchors, num_classes, img_size):
    """Pallas equivalent of DecodeBox.forward.

    inputs: (B, A*(5+num_classes), H, W) float (NCHW, like PyTorch)
    returns: (B, A*H*W, 5+num_classes) float32
    """
    anchors_np = np.asarray(anchors, dtype=np.float32)
    A = anchors_np.shape[0]
    attrs = 5 + num_classes
    B, C, H, W = inputs.shape
    assert C == A * attrs
    HW = H * W
    rows = A * attrs
    stride_h = float(img_size[1]) / H
    stride_w = float(img_size[0]) / W

    # ---- host-side resident constants (loaded into VMEM once) -------------
    gx = np.tile(np.arange(W, dtype=np.float32), H)      # idx % W  (row-major h*W+w)
    gy = np.repeat(np.arange(H, dtype=np.float32), W)    # idx // W
    off = np.zeros((rows, HW), dtype=np.float32)
    scale = np.ones((rows, 1), dtype=np.float32)
    for a in range(A):
        r = a * attrs
        off[r + 0] = gx
        off[r + 1] = gy
        scale[r + 0, 0] = stride_w
        scale[r + 1, 0] = stride_h
        # (anchor / stride) * stride cancels -> fold the raw anchor size directly.
        scale[r + 2, 0] = anchors_np[a, 0]
        scale[r + 3, 0] = anchors_np[a, 1]
    off = jnp.asarray(off)
    scale = jnp.asarray(scale)

    # Pure view (no transpose, no cast): (B, A*attrs, H, W) -> (B, A*attrs, HW)
    pred = inputs.reshape(B, rows, HW)

    # ---- batch tile: amortize the ~0.35us/step grid overhead ----------------
    slab_bytes = rows * HW * 4
    off_bytes = rows * HW * 4
    budget = 24 << 20                                  # safe on v5e/v6e/v7x scoped VMEM
    max_bt = max(1, (budget - off_bytes) // (4 * slab_bytes))  # 2x in + 2x out buffers
    bt = 1
    for d in range(1, B + 1):
        if B % d == 0 and d <= max_bt:
            bt = d
    grid = (B // bt,)

    kernel = functools.partial(_decode_kernel, bbox_attrs=attrs)

    needed = 4 * bt * slab_bytes + off_bytes + (4 << 20)
    vmem_limit = int(min(max(needed, 32 << 20), 64 << 20))

    out = pl.pallas_call(
        kernel,
        out_shape=jax.ShapeDtypeStruct((B, rows, HW), jnp.float32),
        grid=grid,
        in_specs=[
            pl.BlockSpec((bt, rows, HW), lambda b: (b, 0, 0)),   # batch-tile slab
            pl.BlockSpec((rows, HW), lambda b: (0, 0)),          # resident offsets
            pl.BlockSpec((rows, 1), lambda b: (0, 0)),           # resident scales
        ],
        out_specs=pl.BlockSpec((bt, rows, HW), lambda b: (b, 0, 0)),
        compiler_params=pltpu.CompilerParams(
            dimension_semantics=("parallel",),
            vmem_limit_bytes=vmem_limit),
    )(pred, off, scale)

    # Layout glue (XLA transpose) to the PyTorch output layout (B, A*H*W, attrs).
    out = out.reshape(B, A, attrs, HW)
    return jnp.swapaxes(out, 2, 3).reshape(B, A * HW, attrs)


def decode_box_ref(inputs, anchors, num_classes, img_size):
    """Pure-JAX reference mirroring the PyTorch forward exactly."""
    anchors_np = np.asarray(anchors, dtype=np.float32)
    A = anchors_np.shape[0]
    attrs = 5 + num_classes
    B, C, H, W = inputs.shape
    stride_h = img_size[1] / H
    stride_w = img_size[0] / W
    scaled = anchors_np / np.array([stride_w, stride_h], dtype=np.float32)

    pred = inputs.reshape(B, A, attrs, H, W).transpose(0, 1, 3, 4, 2)  # (B,A,H,W,attrs)
    sx = jax.nn.sigmoid(pred[..., 0])
    sy = jax.nn.sigmoid(pred[..., 1])
    w = pred[..., 2]
    h = pred[..., 3]
    conf = jax.nn.sigmoid(pred[..., 4])
    cls = jax.nn.sigmoid(pred[..., 5:])

    gx = jnp.arange(W, dtype=jnp.float32)[None, None, None, :]
    gy = jnp.arange(H, dtype=jnp.float32)[None, None, :, None]
    aw = jnp.asarray(scaled[:, 0])[None, :, None, None]
    ah = jnp.asarray(scaled[:, 1])[None, :, None, None]

    bx = (sx + gx) * stride_w
    by = (sy + gy) * stride_h
    bw = jnp.exp(w) * aw * stride_w
    bh = jnp.exp(h) * ah * stride_h
    boxes = jnp.stack([bx, by, bw, bh], axis=-1)

    return jnp.concatenate(
        [boxes.reshape(B, -1, 4),
         conf.reshape(B, -1, 1),
         cls.reshape(B, -1, num_classes)], axis=-1)


if __name__ == "__main__":
    key = jax.random.PRNGKey(0)
    B, H, W = 2, 16, 16
    anchors = [(10.0, 13.0), (16.0, 30.0), (33.0, 23.0)]
    num_classes = 2
    img_size = (64, 64)
    A = len(anchors)
    attrs = 5 + num_classes

    x = jax.random.normal(key, (B, A * attrs, H, W), dtype=jnp.float32)

    out = decode_box(x, anchors, num_classes, img_size)
    out = jax.block_until_ready(out)

    ref = decode_box_ref(x, anchors, num_classes, img_size)
    assert out.shape == (B, A * H * W, attrs), out.shape
    np.testing.assert_allclose(np.asarray(out), np.asarray(ref),
                               rtol=1e-5, atol=1e-5)
    print("KERNEL_OK")
</pallas_src>

<mosaic_0001>
module attributes {stable_mosaic.version = 11 : i64} {
  func.func @_decode_kernel(%arg0: i32, %arg1: memref<2x21x256xf32, #tpu.memory_space<vmem>>, %arg2: memref<21x256xf32, #tpu.memory_space<vmem>>, %arg3: memref<21x1xf32, #tpu.memory_space<vmem>>, %arg4: memref<2x21x256xf32, #tpu.memory_space<vmem>>) attributes {dimension_semantics = [#tpu.dimension_semantics<parallel>], iteration_bounds = array<i64: 1>, scalar_prefetch = 0 : i64, scratch_operands = 0 : i64, tpu.core_type = #tpu.core_type<tc>, window_params = [{transform_indices = @transform_0, window_bounds = array<i64: 2, 21, 256>}, {pipeline_mode = #tpu.pipeline_mode<synchronous>, transform_indices = @transform_1, window_bounds = array<i64: 21, 256>}, {pipeline_mode = #tpu.pipeline_mode<synchronous>, transform_indices = @transform_2, window_bounds = array<i64: 21, 1>}, {transform_indices = @transform_3, window_bounds = array<i64: 2, 21, 256>}]} {
    %c0 = arith.constant 0 : index
    %c0_0 = arith.constant 0 : index
    %c0_1 = arith.constant 0 : index
    %0 = vector.load %arg1[%c0, %c0_0, %c0_1] : memref<2x21x256xf32, #tpu.memory_space<vmem>>, vector<2x21x256xf32>
    %1 = tpu.iota {dimensions = array<i32: 0>} : vector<21x1xi32>
    %c7_i32 = arith.constant 7 : i32
    %2 = vector.broadcast %c7_i32 : i32 to vector<21x1xi32>
    %3 = arith.remsi %1, %2 : vector<21x1xi32>
    %c2_i32 = arith.constant 2 : i32
    %4 = vector.broadcast %c2_i32 : i32 to vector<21x1xi32>
    %5 = arith.cmpi eq, %3, %4 : vector<21x1xi32>
    %c3_i32 = arith.constant 3 : i32
    %6 = vector.broadcast %c3_i32 : i32 to vector<21x1xi32>
    %7 = arith.cmpi eq, %3, %6 : vector<21x1xi32>
    %8 = arith.ori %5, %7 : vector<21x1xi1>
    %9 = vector.shape_cast %8 : vector<21x1xi1> to vector<1x21x1xi1>
    %10 = arith.negf %0 : vector<2x21x256xf32>
    %11 = math.exp %10 : vector<2x21x256xf32>
    %cst = arith.constant 1.000000e+00 : f32
    %12 = vector.broadcast %cst : f32 to vector<2x21x256xf32>
    %13 = arith.addf %12, %11 : vector<2x21x256xf32>
    %14 = arith.divf %12, %13 : vector<2x21x256xf32>
    %15 = math.exp %0 : vector<2x21x256xf32>
    %c0_2 = arith.constant 0 : index
    %c0_3 = arith.constant 0 : index
    %16 = vector.load %arg2[%c0_2, %c0_3] : memref<21x256xf32, #tpu.memory_space<vmem>>, vector<21x256xf32>
    %17 = vector.shape_cast %16 : vector<21x256xf32> to vector<1x21x256xf32>
    %c0_4 = arith.constant 0 : index
    %c0_5 = arith.constant 0 : index
    %18 = vector.load %arg3[%c0_4, %c0_5] : memref<21x1xf32, #tpu.memory_space<vmem>>, vector<21x1xf32>
    %19 = vector.shape_cast %18 : vector<21x1xf32> to vector<1x21x1xf32>
    %20 = vector.broadcast %17 : vector<1x21x256xf32> to vector<2x21x256xf32>
    %21 = arith.addf %14, %20 : vector<2x21x256xf32>
    %22 = vector.shape_cast %9 : vector<1x21x1xi1> to vector<1x21x1xi1>
    %23 = vector.broadcast %22 : vector<1x21x1xi1> to vector<2x21x256xi1>
    %24 = arith.select %23, %15, %21 : vector<2x21x256xi1>, vector<2x21x256xf32>
    %25 = vector.broadcast %19 : vector<1x21x1xf32> to vector<2x21x256xf32>
    %26 = arith.mulf %24, %25 : vector<2x21x256xf32>
    %c0_6 = arith.constant 0 : index
    %c0_7 = arith.constant 0 : index
    %c0_8 = arith.constant 0 : index
    %27 = vector.load %arg4[%c0_6, %c0_7, %c0_8] : memref<2x21x256xf32, #tpu.memory_space<vmem>>, vector<2x21x256xf32>
    tpu.vector_store %arg4[%c0_6, %c0_7, %c0_8], %26 {strides = array<i32>} : memref<2x21x256xf32, #tpu.memory_space<vmem>>, vector<2x21x256xf32>,
    return
  }
  func.func @transform_0(%arg0: i32) -> (i32, i32, i32) {
    %c0_i32 = arith.constant 0 : i32
    %c0_i32_0 = arith.constant 0 : i32
    %c0_i32_1 = arith.constant 0 : i32
    return %arg0, %c0_i32, %c0_i32_0 : i32, i32, i32
  }
  func.func @transform_1(%arg0: i32) -> (i32, i32) {
    %c0_i32 = arith.constant 0 : i32
    %c0_i32_0 = arith.constant 0 : i32
    %c0_i32_1 = arith.constant 0 : i32
    return %c0_i32, %c0_i32_0 : i32, i32
  }
  func.func @transform_2(%arg0: i32) -> (i32, i32) {
    %c0_i32 = arith.constant 0 : i32
    %c0_i32_0 = arith.constant 0 : i32
    %c0_i32_1 = arith.constant 0 : i32
    return %c0_i32, %c0_i32_0 : i32, i32
  }
  func.func @transform_3(%arg0: i32) -> (i32, i32, i32) {
    %c0_i32 = arith.constant 0 : i32
    %c0_i32_0 = arith.constant 0 : i32
    %c0_i32_1 = arith.constant 0 : i32
    return %arg0, %c0_i32, %c0_i32_0 : i32, i32, i32
  }
}

</mosaic_0001>

<llo_original>
// kernel: tpu_custom_call.1
$region0: #{tpu_custom_call.1}
  #allocation0 [shape = 'u32[]', space=smem, size = 0x4, offset = 0x4, fixed_abs, tag = 'smem constant byte address 0x4 - core index']
  #allocation1 [shape = 'u32[144,128]{1,0:T(1,128)}', space=vmem, size = 0x12000, scoped, tag = 'internal scratch']
  %s0 = inlined_call_operand.vmem [shape: f32[2,21,256], index: 0, kind: input, shape index: {}]
  %s1 = inlined_call_operand.vmem [shape: f32[21,256], index: 1, kind: input, shape index: {}]
  %s2 = inlined_call_operand.vmem [shape: f32[21,1], index: 2, kind: input, shape index: {}]
  %s3 = inlined_call_operand.vmem [shape: f32[2,21,256], index: 3, kind: output, shape index: {}]
  %s4 = sld [smem:[#allocation0]]
  $region22: #{tpu_custom_call.1} parent=0
    _
  %s6 = ssub.s32 1, %s4
  %s7 = scalar_select 0, %s6, %s4
  // Predicated region
  $region2: #{tpu_custom_call.1} parent=0 // pred_check
    _
  $region3: #{tpu_custom_call.1} parent=0 // pred_check_branch
    %9 = sbr.rel (0) target = $region5
  $region4: #{tpu_custom_call.1} parent=0 // pred_region
    _
  $region5: #{tpu_custom_call.1} parent=0 // pred_fallthru
    _
  // Predicated region
  $region6: #{tpu_custom_call.1} parent=0 // pred_check
    _
  $region7: #{tpu_custom_call.1} parent=0 // pred_check_branch
    %11 = sbr.rel (0) target = $region9
  $region8: #{tpu_custom_call.1} parent=0 // pred_region
    _
  $region9: #{tpu_custom_call.1} parent=0 // pred_fallthru
    _
  // Predicated region
  $region10: #{tpu_custom_call.1} parent=0 // pred_check
    _
  $region11: #{tpu_custom_call.1} parent=0 // pred_check_branch
    %13 = sbr.rel (0) target = $region13
  $region12: #{tpu_custom_call.1} parent=0 // pred_region
    _
  $region13: #{tpu_custom_call.1} parent=0 // pred_fallthru
    _
  %v14 = vld [vmem:[%s0] sm:$0xff]
  %v15 = vld [vmem:[%s0 + $0x8] sm:$0xff]
  %v16 = vld [vmem:[%s0 + $0x10] sm:$0xff]
  %v17 = vld [vmem:[%s0 + $0x18] sm:$0xff]
  %v18 = vld [vmem:[%s0 + $0x20] sm:$0x1f]
  %v19 = vld [vmem:[%s0 + $0x28] sm:$0x1f]
  %v20 = vld [vmem:[%s0 + $0x30] sm:$0xff]
  %v21 = vld [vmem:[%s0 + $0x38] sm:$0xff]
  %v22 = vld [vmem:[%s0 + $0x40] sm:$0xff]
  %v23 = vld [vmem:[%s0 + $0x48] sm:$0xff]
  %v24 = vld [vmem:[%s0 + $0x50] sm:$0x1f]
  %v25 = vld [vmem:[%s0 + $0x58] sm:$0x1f]
  %v26 = vlaneseq
  %v27 = vshrl.u32 %v26, 7
  %v28 = vadd.s32 %v27, 8
  %v29 = vadd.s32 %v27, 16
  %vm30 = vcmp.lt.s32.totalorder %v27, 0
  %v31 = vsub.s32 0, %v27
  %v32 = vsel %vm30, %v31, %v27
  %v33 = vmul.u32.u64.compose %v32, 2454267026
  %v34 = vextract.low.u32 %v33
  %v35 = vextract.high.u32 %v33
  %vm36 = vc.u32 %v34, 2454267026
  %v37 = vsel %vm36, 1, 0
  %v38 = vadd.s32 %v35, %v37
  %v39 = vshrl.u32 %v38, 2
  %v40 = vmul.u32 %v39, 7
  %v41 = vsub.s32 %v32, %v40
  %v42 = vsub.s32 0, %v41
  %v43 = vsel %vm30, %v42, %v41
  %vm44 = vcmp.lt.s32.totalorder %v28, 0
  %v45 = vsub.s32 0, %v28
  %v46 = vsel %vm44, %v45, %v28
  %v47 = vmul.u32.u64.compose %v46, 2454267026
  %v48 = vextract.low.u32 %v47
  %v49 = vextract.high.u32 %v47
  %vm50 = vc.u32 %v48, 2454267026
  %v51 = vsel %vm50, 1, 0
  %v52 = vadd.s32 %v49, %v51
  %v53 = vshrl.u32 %v52, 2
  %v54 = vmul.u32 %v53, 7
  %v55 = vsub.s32 %v46, %v54
  %v56 = vsub.s32 0, %v55
  %v57 = vsel %vm44, %v56, %v55
  %vm58 = vcmp.lt.s32.totalorder %v29, 0
  %v59 = vsub.s32 0, %v29
  %v60 = vsel %vm58, %v59, %v29
  %v61 = vmul.u32.u64.compose %v60, 2454267026
  %v62 = vextract.low.u32 %v61
  %v63 = vextract.high.u32 %v61
  %vm64 = vc.u32 %v62, 2454267026
  %v65 = vsel %vm64, 1, 0
  %v66 = vadd.s32 %v63, %v65
  %v67 = vshrl.u32 %v66, 2
  %v68 = vmul.u32 %v67, 7
  %v69 = vsub.s32 %v60, %v68
  %v70 = vsub.s32 0, %v69
  %v71 = vsel %vm58, %v70, %v69
  %vm72 = vcmp.eq.s32.totalorder %v43, 2
  %vm73 = vcmp.eq.s32.totalorder %v57, 2
  %vm74 = vcmp.eq.s32.totalorder %v71, 2
  %vm75 = vcmp.eq.s32.totalorder %v43, 3
  %vm76 = vcmp.eq.s32.totalorder %v57, 3
  %vm77 = vcmp.eq.s32.totalorder %v71, 3
  %vm78 = vmor %vm72, %vm75
  %vm79 = vmor %vm73, %vm76
  %vm80 = vmor %vm74, %vm77
  %v81 = vxor.u32 %v14, 2147483648
  %v82 = vxor.u32 %v15, 2147483648
  %v83 = vxor.u32 %v16, 2147483648
  %v84 = vxor.u32 %v17, 2147483648
  %v85 = vxor.u32 %v18, 2147483648
  %v86 = vxor.u32 %v19, 2147483648
  %v87 = vxor.u32 %v20, 2147483648
  %v88 = vxor.u32 %v21, 2147483648
  %v89 = vxor.u32 %v22, 2147483648
  %v90 = vxor.u32 %v23, 2147483648
  %v91 = vxor.u32 %v24, 2147483648
  %v92 = vxor.u32 %v25, 2147483648
  %v93 = vmul.f32 %v81, 1.442695
  %v94 = vpow.pop %v93
  %v95 = vmul.f32 %v82, 1.442695
  %v96 = vpow.pop %v95
  %v97 = vmul.f32 %v83, 1.442695
  %v98 = vpow.pop %v97
  %v99 = vmul.f32 %v84, 1.442695
  %v100 = vpow.pop %v99
  %v101 = vmul.f32 %v85, 1.442695
  %v102 = vpow.pop %v101
  %v103 = vmul.f32 %v86, 1.442695
  %v104 = vpow.pop %v103
  %v105 = vmul.f32 %v87, 1.442695
  %v106 = vpow.pop %v105
  %v107 = vmul.f32 %v88, 1.442695
  %v108 = vpow.pop %v107
  %v109 = vmul.f32 %v89, 1.442695
  %v110 = vpow.pop %v109
  %v111 = vmul.f32 %v90, 1.442695
  %v112 = vpow.pop %v111
  %v113 = vmul.f32 %v91, 1.442695
  %v114 = vpow.pop %v113
  %v115 = vmul.f32 %v92, 1.442695
  %v116 = vpow.pop %v115
  %v117 = vadd.f32 %v94, 1.0
  %v118 = vadd.f32 %v96, 1.0
  %v119 = vadd.f32 %v98, 1.0
  %v120 = vadd.f32 %v100, 1.0
  %v121 = vadd.f32 %v102, 1.0
  %v122 = vadd.f32 %v104, 1.0
  %v123 = vadd.f32 %v106, 1.0
  %v124 = vadd.f32 %v108, 1.0
  %v125 = vadd.f32 %v110, 1.0
  %v126 = vadd.f32 %v112, 1.0
  %v127 = vadd.f32 %v114, 1.0
  %v128 = vadd.f32 %v116, 1.0
  %v129 = vrcp.pop %v117
  %v130 = vmul.f32 1.0, %v129
  %v131 = vrcp.pop %v118
  %v132 = vmul.f32 1.0, %v131
  %v133 = vrcp.pop %v119
  %v134 = vmul.f32 1.0, %v133
  %v135 = vrcp.pop %v120
  %v136 = vmul.f32 1.0, %v135
  %v137 = vrcp.pop %v121
  %v138 = vmul.f32 1.0, %v137
  %v139 = vrcp.pop %v122
  %v140 = vmul.f32 1.0, %v139
  %v141 = vrcp.pop %v123
  %v142 = vmul.f32 1.0, %v141
  %v143 = vrcp.pop %v124
  %v144 = vmul.f32 1.0, %v143
  %v145 = vrcp.pop %v125
  %v146 = vmul.f32 1.0, %v145
  %v147 = vrcp.pop %v126
  %v148 = vmul.f32 1.0, %v147
  %v149 = vrcp.pop %v127
  %v150 = vmul.f32 1.0, %v149
  %v151 = vrcp.pop %v128
  %v152 = vmul.f32 1.0, %v151
  %v153 = vmul.f32 %v14, 1.442695
  %v154 = vpow.pop %v153
  %v155 = vmul.f32 %v15, 1.442695
  %v156 = vpow.pop %v155
  %v157 = vmul.f32 %v16, 1.442695
  %v158 = vpow.pop %v157
  %v159 = vmul.f32 %v17, 1.442695
  %v160 = vpow.pop %v159
  %v161 = vmul.f32 %v18, 1.442695
  %v162 = vpow.pop %v161
  %v163 = vmul.f32 %v19, 1.442695
  %v164 = vpow.pop %v163
  %v165 = vmul.f32 %v20, 1.442695
  %v166 = vpow.pop %v165
  %v167 = vmul.f32 %v21, 1.442695
  %v168 = vpow.pop %v167
  %v169 = vmul.f32 %v22, 1.442695
  %v170 = vpow.pop %v169
  %v171 = vmul.f32 %v23, 1.442695
  %v172 = vpow.pop %v171
  %v173 = vmul.f32 %v24, 1.442695
  %v174 = vpow.pop %v173
  %v175 = vmul.f32 %v25, 1.442695
  %v176 = vpow.pop %v175
  %v177 = vld [vmem:[%s1] sm:$0xff]
  %v178 = vld [vmem:[%s1 + $0x8] sm:$0xff]
  %v179 = vld [vmem:[%s1 + $0x10] sm:$0xff]
  %v180 = vld [vmem:[%s1 + $0x18] sm:$0xff]
  %v181 = vld [vmem:[%s1 + $0x20] sm:$0x1f]
  %v182 = vld [vmem:[%s1 + $0x28] sm:$0x1f]
  %v183 = vld [vmem:[%s2] sm:$0xff]
  %v184 = vld [vmem:[%s2 + $0x8] sm:$0xff]
  %v185 = vld [vmem:[%s2 + $0x10] sm:$0x1f]
  %v186 = vadd.f32 %v130, %v177
  %v187 = vadd.f32 %v132, %v178
  %v188 = vadd.f32 %v134, %v179
  %v189 = vadd.f32 %v136, %v180
  %v190 = vadd.f32 %v138, %v181
  %v191 = vadd.f32 %v140, %v182
  %v192 = vadd.f32 %v142, %v177
  %v193 = vadd.f32 %v144, %v178
  %v194 = vadd.f32 %v146, %v179
  %v195 = vadd.f32 %v148, %v180
  %v196 = vadd.f32 %v150, %v181
  %v197 = vadd.f32 %v152, %v182
  %v198 = vsel %vm78, 1, 0
  %v199 = vsel %vm79, 1, 0
  %v200 = vsel %vm80, 1, 0
  %vm201 = vcmp.eq.s32.totalorder %v198, 1
  %vm202 = vcmp.eq.s32.totalorder %v199, 1
  %vm203 = vcmp.eq.s32.totalorder %v200, 1
  %v204 = vsel %vm201, %v154, %v186
  %v205 = vsel %vm201, %v156, %v187
  %v206 = vsel %vm202, %v158, %v188
  %v207 = vsel %vm202, %v160, %v189
  %v208 = vsel %vm203, %v162, %v190
  %v209 = vsel %vm203, %v164, %v191
  %v210 = vsel %vm201, %v166, %v192
  %v211 = vsel %vm201, %v168, %v193
  %v212 = vsel %vm202, %v170, %v194
  %v213 = vsel %vm202, %v172, %v195
  %v214 = vsel %vm203, %v174, %v196
  %v215 = vsel %vm203, %v176, %v197
  %217 = vset.pattern.permute.xlu0 0
  %218 = vperm.xlu0 %217, %v183
  %v219 = vpop.permute.xlu0 %218
  %222 = vset.pattern.permute.xlu0 0
  %223 = vperm.xlu0 %222, %v184
  %v224 = vpop.permute.xlu0 %223
  %227 = vset.pattern.permute.xlu0 0
  %228 = vperm.xlu0 %227, %v185
  %v229 = vpop.permute.xlu0 %228
  %v231 = vmul.f32 %v204, %v219
  %v232 = vmul.f32 %v205, %v219
  %v233 = vmul.f32 %v206, %v224
  %v234 = vmul.f32 %v207, %v224
  %v235 = vmul.f32 %v208, %v229
  %v236 = vmul.f32 %v209, %v229
  %v237 = vmul.f32 %v210, %v219
  %v238 = vmul.f32 %v211, %v219
  %v239 = vmul.f32 %v212, %v224
  %v240 = vmul.f32 %v213, %v224
  %v241 = vmul.f32 %v214, %v229
  %v242 = vmul.f32 %v215, %v229
  %243 = vst [vmem:[%s3] sm:$0xff] %v231
  %244 = vst [vmem:[%s3 + $0x8] sm:$0xff] %v232
  %245 = vst [vmem:[%s3 + $0x10] sm:$0xff] %v233
  %246 = vst [vmem:[%s3 + $0x18] sm:$0xff] %v234
  %247 = vst [vmem:[%s3 + $0x20] sm:$0x1f] %v235
  %248 = vst [vmem:[%s3 + $0x28] sm:$0x1f] %v236
  %249 = vst [vmem:[%s3 + $0x30] sm:$0xff] %v237
  %250 = vst [vmem:[%s3 + $0x38] sm:$0xff] %v238
  %251 = vst [vmem:[%s3 + $0x40] sm:$0xff] %v239
  %252 = vst [vmem:[%s3 + $0x48] sm:$0xff] %v240
  %253 = vst [vmem:[%s3 + $0x50] sm:$0x1f] %v241
  %254 = vst [vmem:[%s3 + $0x58] sm:$0x1f] %v242
  // Predicated region
  $region14: #{tpu_custom_call.1} parent=0 // pred_check
    _
  $region15: #{tpu_custom_call.1} parent=0 // pred_check_branch
    %256 = sbr.rel (0) target = $region17
  $region16: #{tpu_custom_call.1} parent=0 // pred_region
    _
  $region17: #{tpu_custom_call.1} parent=0 // pred_fallthru
    _
  // Predicated region
  $region18: #{tpu_custom_call.1} parent=0 // pred_check
    _
  $region19: #{tpu_custom_call.1} parent=0 // pred_check_branch
    %258 = sbr.rel (0) target = $region21
  $region20: #{tpu_custom_call.1} parent=0 // pred_region
    _
  $region21: #{tpu_custom_call.1} parent=0 // pred_fallthru
    _

</llo_original>
